<compile_context>
chip_gen: v6e
topology: v6e:2x2x1
jax: 0.10.0
libtpu: 0.0.40
codegen_flags: <defaults>
</compile_context>

<pallas_src>
import jax
import jax.numpy as jnp
from jax import lax
from jax.experimental import pallas as pl
from jax.experimental.pallas import tpu as pltpu


def _moe_ffn_kernel(order_ref, nact_ref,                      # scalar prefetch (SMEM)
                    x_ref, w1_ref, w3_ref, w2_ref, gate_ref,  # inputs (VMEM)
                    o_ref,                                    # output (VMEM)
                    acc_ref):                                 # f32 scratch (VMEM)
    i = pl.program_id(1)          # compacted expert position
    k = pl.program_id(2)          # intermediate-dim (I) tile
    n_i = pl.num_programs(1)
    n_k = pl.num_programs(2)

    # Resident f32 accumulator over the (expert, I-tile) reduction axes.
    @pl.when((i == 0) & (k == 0))
    def _init():
        acc_ref[...] = jnp.zeros_like(acc_ref)

    # Skip compute entirely for grid steps beyond the number of active experts.
    @pl.when(i < nact_ref[0])
    def _body():
        x = x_ref[...]                     # [tT, D]   (native dtype, e.g. bf16)
        w1 = w1_ref[0]                     # [tI, D]
        w3 = w3_ref[0]                     # [tI, D]
        w2 = w2_ref[0]                     # [D, tI]

        # Contract the last dim of both operands -> no wrapper-side transposes.
        contract_last = (((1,), (1,)), ((), ()))
        x1 = lax.dot_general(x, w1, contract_last,
                             preferred_element_type=jnp.float32)       # [tT, tI]
        x3 = lax.dot_general(x, w3, contract_last,
                             preferred_element_type=jnp.float32)       # [tT, tI]
        up = (x1 * lax.logistic(x1)) * x3                              # silu(x1)*x3, f32
        part = lax.dot_general(up.astype(x.dtype), w2, contract_last,
                               preferred_element_type=jnp.float32)     # [tT, D]

        # Gate for the current expert: pick column e_id from the lane-dense
        # [tT, E] gate slab (routing_map * probs), keep it in f32.
        e_id = order_ref[i]
        gate = gate_ref[...]                                            # [tT, E] f32
        sel = lax.broadcasted_iota(jnp.int32, gate.shape, 1) == e_id
        g = jnp.sum(jnp.where(sel, gate, 0.0), axis=1, keepdims=True)   # [tT, 1]

        acc_ref[...] += g * part

    # Single cast + store of the finished tile.
    @pl.when((i == n_i - 1) & (k == n_k - 1))
    def _finalize():
        o_ref[...] = acc_ref[...].astype(o_ref.dtype)


def conditional_feed_forward(x, routing_map, probs, w1, w2, w3,
                             *, tokens_per_tile=256, inter_per_tile=512,
                             vmem_limit_bytes=None):
    """x: [T, D]; routing_map: [T, E] (0/1); probs: [T, E];
    w1, w3: [E, I, D]; w2: [E, D, I].  Returns [T, D] in x.dtype."""
    T, D = x.shape
    E, I, _ = w1.shape
    assert w2.shape == (E, D, I) and w3.shape == (E, I, D)
    assert routing_map.shape == (T, E) and probs.shape == (T, E)

    tT = min(tokens_per_tile, T)
    tI = min(inter_per_tile, I)
    assert T % tT == 0 and I % tI == 0
    n_k = I // tI

    # Lane-dense per-(token, expert) gate. Inactive (token, expert) pairs are
    # exactly zero here, so the expert skipping below is a pure optimization.
    gate = routing_map.astype(jnp.float32) * probs.astype(jnp.float32)   # [T, E]

    # Compact the expert axis: active experts first; trailing slots repeat the
    # last active expert so their block indices never change (no extra weight
    # DMA) while pl.when(i < num_active) skips their compute.
    counts = jnp.sum(routing_map.astype(jnp.int32), axis=0)              # [E]
    active = counts > 0
    num_active = jnp.sum(active.astype(jnp.int32))
    order = jnp.argsort(jnp.logical_not(active)).astype(jnp.int32)       # active first
    last_active = order[jnp.maximum(num_active - 1, 0)]
    order = jnp.where(jnp.arange(E, dtype=jnp.int32) < num_active, order, last_active)
    num_active = jnp.reshape(num_active, (1,)).astype(jnp.int32)

    # Weight index maps: freeze the I-tile index on inactive steps too, so the
    # block index is literally identical and the pipeline issues no DMA.
    def w13_map(t, i, k, order_ref, nact_ref):
        kk = jnp.where(i < nact_ref[0], k, n_k - 1)
        return (order_ref[i], kk, 0)

    def w2_map(t, i, k, order_ref, nact_ref):
        kk = jnp.where(i < nact_ref[0], k, n_k - 1)
        return (order_ref[i], 0, kk)

    grid_spec = pltpu.PrefetchScalarGridSpec(
        num_scalar_prefetch=2,
        grid=(T // tT, E, n_k),
        in_specs=[
            pl.BlockSpec((tT, D), lambda t, i, k, *_: (t, 0)),   # x: resident per token tile
            pl.BlockSpec((1, tI, D), w13_map),                   # w1[e] I-tile (native layout)
            pl.BlockSpec((1, tI, D), w13_map),                   # w3[e] I-tile
            pl.BlockSpec((1, D, tI), w2_map),                    # w2[e] I-tile
            pl.BlockSpec((tT, E), lambda t, i, k, *_: (t, 0)),   # gate: resident per token tile
        ],
        out_specs=pl.BlockSpec((tT, D), lambda t, i, k, *_: (t, 0)),
        scratch_shapes=[pltpu.VMEM((tT, D), jnp.float32)],
    )

    cp_kwargs = dict(dimension_semantics=("parallel", "arbitrary", "arbitrary"))
    if vmem_limit_bytes is not None:   # raise scoped VMEM for large tiles (tune per chip)
        cp_kwargs["vmem_limit_bytes"] = vmem_limit_bytes

    return pl.pallas_call(
        _moe_ffn_kernel,
        out_shape=jax.ShapeDtypeStruct((T, D), x.dtype),
        grid_spec=grid_spec,
        compiler_params=pltpu.CompilerParams(**cp_kwargs),
    )(order, num_active, x, w1, w3, w2, gate)


def _reference(x, routing_map, probs, w1, w2, w3):
    """Pure-JAX f32 reference with the PyTorch dense-mask semantics."""
    xf = x.astype(jnp.float32)
    out = jnp.zeros_like(xf)
    for e in range(w1.shape[0]):
        x1 = xf @ w1[e].astype(jnp.float32).T
        x3 = xf @ w3[e].astype(jnp.float32).T
        up = jax.nn.silu(x1) * x3
        down = up @ w2[e].astype(jnp.float32).T
        g = (routing_map[:, e].astype(jnp.float32) * probs[:, e].astype(jnp.float32))[:, None]
        out = out + g * down
    return out


if __name__ == "__main__":
    # ModelArgs: dim=16, intermediate_size=64, num_experts=8, router_topk=2
    dim, inter, n_experts, topk = 16, 64, 8, 2
    n_tokens = 8

    key = jax.random.PRNGKey(0)
    kx, k1, k2, k3, kr = jax.random.split(key, 5)

    dtype = jnp.bfloat16   # realistic MoE dtype: bf16 inputs, f32 MXU accumulation
    x = jax.random.normal(kx, (n_tokens, dim), dtype=jnp.float32).astype(dtype)
    w1 = (jax.random.normal(k1, (n_experts, inter, dim), jnp.float32) * 0.1).astype(dtype)
    w2 = (jax.random.normal(k2, (n_experts, dim, inter), jnp.float32) * 0.1).astype(dtype)
    w3 = (jax.random.normal(k3, (n_experts, inter, dim), jnp.float32) * 0.1).astype(dtype)

    # Router: top-2 binary routing map ("expert_indices") + softmax probs
    # ("expert_weights"), matching how the PyTorch module consumes them.
    logits = jax.random.normal(kr, (n_tokens, n_experts), dtype=jnp.float32)
    _, top_idx = jax.lax.top_k(logits, topk)
    routing_map = jnp.sum(jax.nn.one_hot(top_idx, n_experts, dtype=jnp.float32), axis=1)
    probs = jax.nn.softmax(logits, axis=-1)

    out = conditional_feed_forward(x, routing_map, probs, w1, w2, w3)
    out = jax.block_until_ready(out)

    ref = _reference(x, routing_map, probs, w1, w2, w3)
    assert out.shape == (n_tokens, dim)
    assert jnp.allclose(out.astype(jnp.float32), ref, rtol=2e-2, atol=2e-2), \
        "mismatch vs reference"

    print("KERNEL_OK")
</pallas_src>

<mosaic_0001>
module attributes {stable_mosaic.version = 11 : i64} {
  func.func @_moe_ffn_kernel(%arg0: i32, %arg1: i32, %arg2: i32, %arg3: memref<8xi32, #tpu.memory_space<smem>>, %arg4: memref<1xi32, #tpu.memory_space<smem>>, %arg5: memref<8x16xbf16, #tpu.memory_space<vmem>>, %arg6: memref<1x64x16xbf16, #tpu.memory_space<vmem>>, %arg7: memref<1x64x16xbf16, #tpu.memory_space<vmem>>, %arg8: memref<1x16x64xbf16, #tpu.memory_space<vmem>>, %arg9: memref<8x8xf32, #tpu.memory_space<vmem>>, %arg10: memref<8x16xbf16, #tpu.memory_space<vmem>>, %arg11: memref<8x16xf32, #tpu.memory_space<vmem>>) attributes {dimension_semantics = [#tpu.dimension_semantics<parallel>, #tpu.dimension_semantics<arbitrary>, #tpu.dimension_semantics<arbitrary>], iteration_bounds = array<i64: 1, 8, 1>, scalar_prefetch = 2 : i64, scratch_operands = 1 : i64, tpu.core_type = #tpu.core_type<tc>, window_params = [{transform_indices = @transform_0, window_bounds = array<i64: 8, 16>}, {transform_indices = @transform_1, window_bounds = array<i64: 1, 64, 16>}, {transform_indices = @transform_2, window_bounds = array<i64: 1, 64, 16>}, {transform_indices = @transform_3, window_bounds = array<i64: 1, 16, 64>}, {transform_indices = @transform_4, window_bounds = array<i64: 8, 8>}, {transform_indices = @transform_5, window_bounds = array<i64: 8, 16>}]} {
    %c0_i32 = arith.constant 0 : i32
    %0 = arith.cmpi eq, %arg1, %c0_i32 : i32
    %c0_i32_0 = arith.constant 0 : i32
    %1 = arith.cmpi eq, %arg2, %c0_i32_0 : i32
    %2 = arith.andi %0, %1 : i1
    %3 = arith.extui %2 : i1 to i32
    %c0_i32_1 = arith.constant 0 : i32
    %4 = arith.cmpi ne, %3, %c0_i32_1 : i32
    scf.if %4 {
      %cst = arith.constant 0.000000e+00 : f32
      %14 = vector.broadcast %cst : f32 to vector<8x16xf32>
      %c0_5 = arith.constant 0 : index
      %c0_6 = arith.constant 0 : index
      %15 = vector.load %arg11[%c0_5, %c0_6] : memref<8x16xf32, #tpu.memory_space<vmem>>, vector<8x16xf32>
      tpu.vector_store %arg11[%c0_5, %c0_6], %14 {strides = array<i32>} : memref<8x16xf32, #tpu.memory_space<vmem>>, vector<8x16xf32>,
    } else {
    }
    %c0 = arith.constant 0 : index
    %5 = memref.load %arg4[%c0] : memref<1xi32, #tpu.memory_space<smem>>
    %6 = arith.cmpi slt, %arg1, %5 : i32
    %7 = arith.extui %6 : i1 to i32
    %c0_i32_2 = arith.constant 0 : i32
    %8 = arith.cmpi ne, %7, %c0_i32_2 : i32
    scf.if %8 {
      %c0_5 = arith.constant 0 : index
      %c0_6 = arith.constant 0 : index
      %14 = vector.load %arg5[%c0_5, %c0_6] : memref<8x16xbf16, #tpu.memory_space<vmem>>, vector<8x16xbf16>
      %c0_7 = arith.constant 0 : index
      %c0_8 = arith.constant 0 : index
      %c0_9 = arith.constant 0 : index
      %15 = vector.load %arg6[%c0_7, %c0_8, %c0_9] : memref<1x64x16xbf16, #tpu.memory_space<vmem>>, vector<1x64x16xbf16>
      %16 = vector.shape_cast %15 : vector<1x64x16xbf16> to vector<64x16xbf16>
      %c0_10 = arith.constant 0 : index
      %c0_11 = arith.constant 0 : index
      %c0_12 = arith.constant 0 : index
      %17 = vector.load %arg7[%c0_10, %c0_11, %c0_12] : memref<1x64x16xbf16, #tpu.memory_space<vmem>>, vector<1x64x16xbf16>
      %18 = vector.shape_cast %17 : vector<1x64x16xbf16> to vector<64x16xbf16>
      %c0_13 = arith.constant 0 : index
      %c0_14 = arith.constant 0 : index
      %c0_15 = arith.constant 0 : index
      %19 = vector.load %arg8[%c0_13, %c0_14, %c0_15] : memref<1x16x64xbf16, #tpu.memory_space<vmem>>, vector<1x16x64xbf16>
      %20 = vector.shape_cast %19 : vector<1x16x64xbf16> to vector<16x64xbf16>
      %cst = arith.constant dense<0.000000e+00> : vector<8x64xf32>
      %21 = tpu.matmul %14, %16, %cst {dimension_numbers = #tpu.dot_dimension_numbers<[1], [1], [0], [0], [0, 0, 1, 0], [], []>} : vector<8x16xbf16>, vector<64x16xbf16>, vector<8x64xf32> -> vector<8x64xf32>
      %cst_16 = arith.constant dense<0.000000e+00> : vector<8x64xf32>
      %22 = tpu.matmul %14, %18, %cst_16 {dimension_numbers = #tpu.dot_dimension_numbers<[1], [1], [0], [0], [0, 0, 1, 0], [], []>} : vector<8x16xbf16>, vector<64x16xbf16>, vector<8x64xf32> -> vector<8x64xf32>
      %23 = arith.negf %21 : vector<8x64xf32>
      %24 = math.exp %23 : vector<8x64xf32>
      %cst_17 = arith.constant 1.000000e+00 : f32
      %25 = vector.broadcast %cst_17 : f32 to vector<8x64xf32>
      %26 = arith.addf %25, %24 : vector<8x64xf32>
      %27 = arith.divf %25, %26 : vector<8x64xf32>
      %28 = arith.mulf %21, %27 : vector<8x64xf32>
      %29 = arith.mulf %28, %22 : vector<8x64xf32>
      %30 = arith.truncf %29 : vector<8x64xf32> to vector<8x64xbf16>
      %cst_18 = arith.constant dense<0.000000e+00> : vector<8x16xf32>
      %31 = tpu.matmul %30, %20, %cst_18 {dimension_numbers = #tpu.dot_dimension_numbers<[1], [1], [0], [0], [0, 0, 1, 0], [], []>} : vector<8x64xbf16>, vector<16x64xbf16>, vector<8x16xf32> -> vector<8x16xf32>
      %32 = arith.index_cast %arg1 : i32 to index
      %33 = memref.load %arg3[%32] : memref<8xi32, #tpu.memory_space<smem>>
      %c0_19 = arith.constant 0 : index
      %c0_20 = arith.constant 0 : index
      %34 = vector.load %arg9[%c0_19, %c0_20] : memref<8x8xf32, #tpu.memory_space<vmem>>, vector<8x8xf32>
      %35 = tpu.iota {dimensions = array<i32: 1>} : vector<8x8xi32>
      %36 = vector.broadcast %33 : i32 to vector<8x8xi32>
      %37 = arith.cmpi eq, %35, %36 : vector<8x8xi32>
      %cst_21 = arith.constant 0.000000e+00 : f32
      %38 = vector.broadcast %cst_21 : f32 to vector<8x8xf32>
      %39 = arith.select %37, %34, %38 : vector<8x8xi1>, vector<8x8xf32>
      %cst_22 = arith.constant dense<0.000000e+00> : vector<8xf32>
      %40 = vector.multi_reduction <add>, %39, %cst_22 [1] : vector<8x8xf32> to vector<8xf32>
      %41 = vector.shape_cast %40 : vector<8xf32> to vector<8x1xf32>
      %c0_23 = arith.constant 0 : index
      %c0_24 = arith.constant 0 : index
      %42 = vector.load %arg11[%c0_23, %c0_24] : memref<8x16xf32, #tpu.memory_space<vmem>>, vector<8x16xf32>
      %43 = vector.broadcast %41 : vector<8x1xf32> to vector<8x16xf32>
      %44 = arith.mulf %43, %31 : vector<8x16xf32>
      %45 = arith.addf %42, %44 : vector<8x16xf32>
      %c0_25 = arith.constant 0 : index
      %c0_26 = arith.constant 0 : index
      %46 = vector.load %arg11[%c0_25, %c0_26] : memref<8x16xf32, #tpu.memory_space<vmem>>, vector<8x16xf32>
      tpu.vector_store %arg11[%c0_25, %c0_26], %45 {strides = array<i32>} : memref<8x16xf32, #tpu.memory_space<vmem>>, vector<8x16xf32>,
    } else {
    }
    %c7_i32 = arith.constant 7 : i32
    %9 = arith.cmpi eq, %arg1, %c7_i32 : i32
    %c0_i32_3 = arith.constant 0 : i32
    %10 = arith.cmpi eq, %arg2, %c0_i32_3 : i32
    %11 = arith.andi %9, %10 : i1
    %12 = arith.extui %11 : i1 to i32
    %c0_i32_4 = arith.constant 0 : i32
    %13 = arith.cmpi ne, %12, %c0_i32_4 : i32
    scf.if %13 {
      %c0_5 = arith.constant 0 : index
      %c0_6 = arith.constant 0 : index
      %14 = vector.load %arg11[%c0_5, %c0_6] : memref<8x16xf32, #tpu.memory_space<vmem>>, vector<8x16xf32>
      %15 = arith.truncf %14 : vector<8x16xf32> to vector<8x16xbf16>
      %c0_7 = arith.constant 0 : index
      %c0_8 = arith.constant 0 : index
      %16 = vector.load %arg10[%c0_7, %c0_8] : memref<8x16xbf16, #tpu.memory_space<vmem>>, vector<8x16xbf16>
      tpu.vector_store %arg10[%c0_7, %c0_8], %15 {strides = array<i32>} : memref<8x16xbf16, #tpu.memory_space<vmem>>, vector<8x16xbf16>,
    } else {
    }
    return
  }
  func.func @transform_0(%arg0: i32, %arg1: i32, %arg2: i32, %arg3: memref<8xi32, #tpu.memory_space<smem>>, %arg4: memref<1xi32, #tpu.memory_space<smem>>) -> (i32, i32) {
    %c0_i32 = arith.constant 0 : i32
    %c0_i32_0 = arith.constant 0 : i32
    return %arg0, %c0_i32 : i32, i32
  }
  func.func @transform_1(%arg0: i32, %arg1: i32, %arg2: i32, %arg3: memref<8xi32, #tpu.memory_space<smem>>, %arg4: memref<1xi32, #tpu.memory_space<smem>>) -> (i32, i32, i32) {
    %c0 = arith.constant 0 : index
    %0 = memref.load %arg4[%c0] : memref<1xi32, #tpu.memory_space<smem>>
    %1 = arith.cmpi slt, %arg1, %0 : i32
    %c0_i32 = arith.constant 0 : i32
    %2 = arith.select %1, %arg2, %c0_i32 : i32
    %3 = arith.index_cast %arg1 : i32 to index
    %4 = memref.load %arg3[%3] : memref<8xi32, #tpu.memory_space<smem>>
    %c0_i32_0 = arith.constant 0 : i32
    %c0_i32_1 = arith.constant 0 : i32
    return %4, %2, %c0_i32_0 : i32, i32, i32
  }
  func.func @transform_2(%arg0: i32, %arg1: i32, %arg2: i32, %arg3: memref<8xi32, #tpu.memory_space<smem>>, %arg4: memref<1xi32, #tpu.memory_space<smem>>) -> (i32, i32, i32) {
    %c0 = arith.constant 0 : index
    %0 = memref.load %arg4[%c0] : memref<1xi32, #tpu.memory_space<smem>>
    %1 = arith.cmpi slt, %arg1, %0 : i32
    %c0_i32 = arith.constant 0 : i32
    %2 = arith.select %1, %arg2, %c0_i32 : i32
    %3 = arith.index_cast %arg1 : i32 to index
    %4 = memref.load %arg3[%3] : memref<8xi32, #tpu.memory_space<smem>>
    %c0_i32_0 = arith.constant 0 : i32
    %c0_i32_1 = arith.constant 0 : i32
    return %4, %2, %c0_i32_0 : i32, i32, i32
  }
  func.func @transform_3(%arg0: i32, %arg1: i32, %arg2: i32, %arg3: memref<8xi32, #tpu.memory_space<smem>>, %arg4: memref<1xi32, #tpu.memory_space<smem>>) -> (i32, i32, i32) {
    %c0 = arith.constant 0 : index
    %0 = memref.load %arg4[%c0] : memref<1xi32, #tpu.memory_space<smem>>
    %1 = arith.cmpi slt, %arg1, %0 : i32
    %c0_i32 = arith.constant 0 : i32
    %2 = arith.select %1, %arg2, %c0_i32 : i32
    %3 = arith.index_cast %arg1 : i32 to index
    %4 = memref.load %arg3[%3] : memref<8xi32, #tpu.memory_space<smem>>
    %c0_i32_0 = arith.constant 0 : i32
    %c0_i32_1 = arith.constant 0 : i32
    return %4, %c0_i32_0, %2 : i32, i32, i32
  }
  func.func @transform_4(%arg0: i32, %arg1: i32, %arg2: i32, %arg3: memref<8xi32, #tpu.memory_space<smem>>, %arg4: memref<1xi32, #tpu.memory_space<smem>>) -> (i32, i32) {
    %c0_i32 = arith.constant 0 : i32
    %c0_i32_0 = arith.constant 0 : i32
    return %arg0, %c0_i32 : i32, i32
  }
  func.func @transform_5(%arg0: i32, %arg1: i32, %arg2: i32, %arg3: memref<8xi32, #tpu.memory_space<smem>>, %arg4: memref<1xi32, #tpu.memory_space<smem>>) -> (i32, i32) {
    %c0_i32 = arith.constant 0 : i32
    %c0_i32_0 = arith.constant 0 : i32
    return %arg0, %c0_i32 : i32, i32
  }
}

</mosaic_0001>

<llo_original>
// kernel: tpu_custom_call.1
$region0: #{tpu_custom_call.1}
  #allocation0 [shape = 'u32[]', space=smem, size = 0x4, offset = 0x4, fixed_abs, tag = 'smem constant byte address 0x4 - core index']
  #allocation1 [shape = 'u32[144,128]{1,0:T(1,128)}', space=vmem, size = 0x12000, scoped, tag = 'internal scratch']
  #allocation2 [shape = 'f32[8,16]{1,0:T(8,128)}', space=vmem, size = 0x1000, scoped, tag = 'scratch operand']
  #allocation3 [shape = 's32[1]{0}', space=sflag, size = 0x4, scoped, tag = 'scoped memory for tpu_custom_call.1']
  #allocation4 [shape = 'u8[512]{0}', space=smem, size = 0x200, scoped, tag = 'prefetched SMEM operand 0']
  #allocation5 [shape = 's32[1]{0:T(128)S(6)}', space=smem, size = 0x200, scoped, tag = 'prefetched SMEM operand 1']
  %s0 = inlined_call_operand.vmem [shape: s32[8], index: 0, kind: input, shape index: {}]
  %s1 = inlined_call_operand.<no memory space> [shape: s32[1], index: 1, kind: input, shape index: {}]
  %s2 = inlined_call_operand.vmem [shape: bf16[8,16], index: 2, kind: input, shape index: {}]
  %s3 = inlined_call_operand.vmem [shape: bf16[8,64,16], index: 3, kind: input, shape index: {}]
  %s4 = inlined_call_operand.vmem [shape: bf16[8,64,16], index: 4, kind: input, shape index: {}]
  %s5 = inlined_call_operand.vmem [shape: bf16[8,16,64], index: 5, kind: input, shape index: {}]
  %s6 = inlined_call_operand.vmem [shape: f32[8,8], index: 6, kind: input, shape index: {}]
  %s7 = inlined_call_operand.hbm [shape: bf16[8,16], index: 7, kind: output, shape index: {}]
  %s8 = sld [smem:[#allocation0]]
  $region65: #{tpu_custom_call.1} parent=0
    _
  %s10 = ssub.s32 1, %s8
  %s11 = scalar_select 0, %s10, %s8
  %s12 = sshll.u32 %s0, 4
  %s13 = int_to_ptr.vmem [resolvable:$true] %s12
  %15 = dma.vmem_to_smem %s13, 16, [#allocation4], [#allocation3]
  %16 = sst [smem:[#allocation5]] %s1
  %17 = dma.done [#allocation3], 16
  %18 = sfence
  $region1: #{tpu_custom_call.1} parent=0
    #allocation6 [shape = 'u8[2048]{0}', space=vmem, size = 0x800, scoped, tag = 'output window, operand 0, single buffered']
    #allocation7 [shape = 's32[2]{0}', space=sflag, size = 0x8, scoped, tag = 'scoped memory for tpu_custom_call.1']
    %19 = vsyncpa [#allocation7], 0
    loop: start=0, step=1, limit=10
    $region2: #{tpu_custom_call.1} parent=1 // loop_pre_header
      _
    $region3: #{tpu_custom_call.1} parent=1 // loop_header
      %s21 = sphi 0, %s25
      %p22 = scmp.ge.s32.totalorder %s21, 10
      %s28 = sphi 0, %s47
      %s29 = sphi 0, %s43
      %s30 = sphi 0, %s39
      %s31 = sphi 0, %s28
      %s32 = sphi 0, %s29
      %s33 = sphi 0, %s30
      %s34 = sphi 0, %s31
      %s35 = sphi 0, %s32
      %s36 = sphi 0, %s33
      %s50 = sphi 0, %s52
      %s53 = sphi 0, %s50
      %s54 = sphi 0, %s53
      %s70 = sphi 0, %s54
      %s86 = sphi 0, %s88
      %s89 = sphi 0, %s86
      %s90 = sphi 0, %s89
      %s106 = sphi 0, %s90
      %s122 = sphi 0, %s124
      %s125 = sphi 0, %s122
      %s126 = sphi 0, %s125
      %s142 = sphi 0, %s126
      %s158 = sphi 0, %s160
      %s161 = sphi 0, %s158
      %s162 = sphi 0, %s161
      %s178 = sphi 0, %s162
      %s184 = sphi 0, %s186
      %s187 = sphi 0, %s184
      %s188 = sphi 0, %s187
      %s204 = sphi 0, %s188
      %s210 = sphi 0, %s212
      %s213 = sphi 0, %s210
      %s214 = sphi 0, %s213
      %s230 = sphi 0, %s214
    $region4: #{tpu_custom_call.1} parent=1 // loop_header_branch
      %24 = sbr.rel (%p22) target = $region8
    $region5: #{tpu_custom_call.1} parent=1 // loop_body
      %s26 = ssub.s32 %s21, 1
      %s27 = ssub.s32 %s21, 2
      %s37 = sadd.s32 1, %s30
      %p38 = scmp.ge.s32.totalorder %s37, 1
      %s39 = scalar_select %p38, 0, %s37
      %s40 = sadd.s32 1, %s29
      %s41 = scalar_select %p38, %s40, %s29
      %p42 = scmp.ge.s32.totalorder %s41, 8
      %s43 = scalar_select %p42, 0, %s41
      %s44 = sadd.s32 1, %s28
      %s45 = scalar_select %p42, %s44, %s28
      %p46 = scmp.ge.s32.totalorder %s45, 1
      %s47 = scalar_select %p46, 0, %s45
      %s48 = ssub.s32 %s28, %s47
      %p49 = scmp.eq.s32.totalorder %s48, 0
      %s51 = sadd.s32 %s50, 1
      %s52 = scalar_select %p49, %s50, %s51
      %p55 = pneg %p49
      %p56 = scmp.eq.s32.totalorder %s21, 7
      %p57 = por %p55, %p56
      %p58 = scmp.ne.s32.totalorder %s50, %s53
      %p59 = scmp.eq.s32.totalorder %s21, 0
      %p60 = por %p58, %p59
      %p61 = scmp.ne.s32.totalorder %s50, %s53
      %p62 = scmp.eq.s32.totalorder %s26, 7
      %p63 = por %p61, %p62
      %p64 = scmp.ne.s32.totalorder %s53, %s54
      %p65 = scmp.eq.s32.totalorder %s26, 0
      %p66 = por %p64, %p65
      %p67 = scmp.ne.s32.totalorder %s53, %s54
      %p68 = scmp.eq.s32.totalorder %s27, 7
      %p69 = por %p67, %p68
      %p71 = scmp.ne.s32.totalorder %s54, %s70
      %p72 = scmp.eq.s32.totalorder %s27, 0
      %p73 = por %p71, %p72
      %s74 = sld [smem:[#allocation5]]
      %p75 = scmp.lt.s32.totalorder %s29, %s74
      %s76 = scalar_select %p75, %s30, 0
      %s77 = sld [smem:[#allocation4 + %s29]]
      %s78 = sld [smem:[#allocation5]]
      %p79 = scmp.lt.s32.totalorder %s43, %s78
      %s80 = scalar_select %p79, %s39, 0
      %s81 = sld [smem:[#allocation4 + %s43]]
      %s82 = ssub.s32 %s77, %s81
      %s83 = ssub.s32 %s76, %s80
      %s84 = sor.u32 %s82, %s83
      %p85 = scmp.eq.s32.totalorder %s84, 0
      %s87 = sadd.s32 %s86, 1
      %s88 = scalar_select %p85, %s86, %s87
      %p91 = pneg %p85
      %p92 = scmp.eq.s32.totalorder %s21, 7
      %p93 = por %p91, %p92
      %p94 = scmp.ne.s32.totalorder %s86, %s89
      %p95 = scmp.eq.s32.totalorder %s21, 0
      %p96 = por %p94, %p95
      %p97 = scmp.ne.s32.totalorder %s86, %s89
      %p98 = scmp.eq.s32.totalorder %s26, 7
      %p99 = por %p97, %p98
      %p100 = scmp.ne.s32.totalorder %s89, %s90
      %p101 = scmp.eq.s32.totalorder %s26, 0
      %p102 = por %p100, %p101
      %p103 = scmp.ne.s32.totalorder %s89, %s90
      %p104 = scmp.eq.s32.totalorder %s27, 7
      %p105 = por %p103, %p104
      %p107 = scmp.ne.s32.totalorder %s90, %s106
      %p108 = scmp.eq.s32.totalorder %s27, 0
      %p109 = por %p107, %p108
      %s110 = sld [smem:[#allocation5]]
      %p111 = scmp.lt.s32.totalorder %s29, %s110
      %s112 = scalar_select %p111, %s30, 0
      %s113 = sld [smem:[#allocation4 + %s29]]
      %s114 = sld [smem:[#allocation5]]
      %p115 = scmp.lt.s32.totalorder %s43, %s114
      %s116 = scalar_select %p115, %s39, 0
      %s117 = sld [smem:[#allocation4 + %s43]]
      %s118 = ssub.s32 %s113, %s117
      %s119 = ssub.s32 %s112, %s116
      %s120 = sor.u32 %s118, %s119
      %p121 = scmp.eq.s32.totalorder %s120, 0
      %s123 = sadd.s32 %s122, 1
      %s124 = scalar_select %p121, %s122, %s123
      %p127 = pneg %p121
      %p128 = scmp.eq.s32.totalorder %s21, 7
      %p129 = por %p127, %p128
      %p130 = scmp.ne.s32.totalorder %s122, %s125
      %p131 = scmp.eq.s32.totalorder %s21, 0
      %p132 = por %p130, %p131
      %p133 = scmp.ne.s32.totalorder %s122, %s125
      %p134 = scmp.eq.s32.totalorder %s26, 7
      %p135 = por %p133, %p134
      %p136 = scmp.ne.s32.totalorder %s125, %s126
      %p137 = scmp.eq.s32.totalorder %s26, 0
      %p138 = por %p136, %p137
      %p139 = scmp.ne.s32.totalorder %s125, %s126
      %p140 = scmp.eq.s32.totalorder %s27, 7
      %p141 = por %p139, %p140
      %p143 = scmp.ne.s32.totalorder %s126, %s142
      %p144 = scmp.eq.s32.totalorder %s27, 0
      %p145 = por %p143, %p144
      %s146 = sld [smem:[#allocation5]]
      %p147 = scmp.lt.s32.totalorder %s29, %s146
      %s148 = scalar_select %p147, %s30, 0
      %s149 = sld [smem:[#allocation4 + %s29]]
      %s150 = sld [smem:[#allocation5]]
      %p151 = scmp.lt.s32.totalorder %s43, %s150
      %s152 = scalar_select %p151, %s39, 0
      %s153 = sld [smem:[#allocation4 + %s43]]
      %s154 = ssub.s32 %s149, %s153
      %s155 = ssub.s32 %s148, %s152
      %s156 = sor.u32 %s154, %s155
      %p157 = scmp.eq.s32.totalorder %s156, 0
      %s159 = sadd.s32 %s158, 1
      %s160 = scalar_select %p157, %s158, %s159
      %p163 = pneg %p157
      %p164 = scmp.eq.s32.totalorder %s21, 7
      %p165 = por %p163, %p164
      %p166 = scmp.ne.s32.totalorder %s158, %s161
      %p167 = scmp.eq.s32.totalorder %s21, 0
      %p168 = por %p166, %p167
      %p169 = scmp.ne.s32.totalorder %s158, %s161
      %p170 = scmp.eq.s32.totalorder %s26, 7
      %p171 = por %p169, %p170
      %p172 = scmp.ne.s32.totalorder %s161, %s162
      %p173 = scmp.eq.s32.totalorder %s26, 0
      %p174 = por %p172, %p173
      %p175 = scmp.ne.s32.totalorder %s161, %s162
      %p176 = scmp.eq.s32.totalorder %s27, 7
      %p177 = por %p175, %p176
      %p179 = scmp.ne.s32.totalorder %s162, %s178
      %p180 = scmp.eq.s32.totalorder %s27, 0
      %p181 = por %p179, %p180
      %s182 = ssub.s32 %s28, %s47
      %p183 = scmp.eq.s32.totalorder %s182, 0
      %s185 = sadd.s32 %s184, 1
      %s186 = scalar_select %p183, %s184, %s185
      %p189 = pneg %p183
      %p190 = scmp.eq.s32.totalorder %s21, 7
      %p191 = por %p189, %p190
      %p192 = scmp.ne.s32.totalorder %s184, %s187
      %p193 = scmp.eq.s32.totalorder %s21, 0
      %p194 = por %p192, %p193
      %p195 = scmp.ne.s32.totalorder %s184, %s187
      %p196 = scmp.eq.s32.totalorder %s26, 7
      %p197 = por %p195, %p196
      %p198 = scmp.ne.s32.totalorder %s187, %s188
      %p199 = scmp.eq.s32.totalorder %s26, 0
      %p200 = por %p198, %p199
      %p201 = scmp.ne.s32.totalorder %s187, %s188
      %p202 = scmp.eq.s32.totalorder %s27, 7
      %p203 = por %p201, %p202
      %p205 = scmp.ne.s32.totalorder %s188, %s204
      %p206 = scmp.eq.s32.totalorder %s27, 0
      %p207 = por %p205, %p206
      %s208 = ssub.s32 %s28, %s47
      %p209 = scmp.eq.s32.totalorder %s208, 0
      %s211 = sadd.s32 %s210, 1
      %s212 = scalar_select %p209, %s210, %s211
      %p215 = pneg %p209
      %p216 = scmp.eq.s32.totalorder %s21, 7
      %p217 = por %p215, %p216
      %p218 = scmp.ne.s32.totalorder %s210, %s213
      %p219 = scmp.eq.s32.totalorder %s21, 0
      %p220 = por %p218, %p219
      %p221 = scmp.ne.s32.totalorder %s210, %s213
      %p222 = scmp.eq.s32.totalorder %s26, 7
      %p223 = por %p221, %p222
      %p224 = scmp.ne.s32.totalorder %s213, %s214
      %p225 = scmp.eq.s32.totalorder %s26, 0
      %p226 = por %p224, %p225
      %p227 = scmp.ne.s32.totalorder %s213, %s214
      %p228 = scmp.eq.s32.totalorder %s27, 7
      %p229 = por %p227, %p228
      %p231 = scmp.ne.s32.totalorder %s214, %s230
      %p232 = scmp.eq.s32.totalorder %s27, 0
      %p233 = por %p231, %p232
      %p234 = scmp.le.s32.totalorder 1, %s21
      %p235 = scmp.lt.s32.totalorder %s21, 9
      %p236 = pnand %p234, %p235
      %p237 = pneg %p236
      // Predicated region
      $region9: #{tpu_custom_call.1} parent=5 // pred_check
        _
      $region10: #{tpu_custom_call.1} parent=5 // pred_check_branch
        %239 = sbr.rel (%p236) target = $region12
      $region11: #{tpu_custom_call.1} parent=5 // pred_region
        %s240 = ssub.s32 %s21, 1
        // Predicated region
        $region13: #{tpu_custom_call.1} parent=11 // pred_check
          %p241 = pneg %p66
        $region14: #{tpu_custom_call.1} parent=11 // pred_check_branch
          %243 = sbr.rel (%p241) target = $region16
        $region15: #{tpu_custom_call.1} parent=11 // pred_region
          %p244 = scmp.lt.s32.totalorder %s31, 0
          %s245 = scalar_select %p244, %s31, 0
          %s246 = smul.addr %s245, 4
          %s247 = scalar_lea.vmem %s2, %s246
        $region16: #{tpu_custom_call.1} parent=11 // pred_fallthru
          _
        // Predicated region
        $region17: #{tpu_custom_call.1} parent=11 // pred_check
          %p248 = pneg %p200
        $region18: #{tpu_custom_call.1} parent=11 // pred_check_branch
          %250 = sbr.rel (%p248) target = $region20
        $region19: #{tpu_custom_call.1} parent=11 // pred_region
          %p251 = scmp.lt.s32.totalorder %s31, 0
          %s252 = scalar_select %p251, %s31, 0
          %s253 = smul.addr %s252, 8
          %s254 = scalar_lea.vmem %s6, %s253
        $region20: #{tpu_custom_call.1} parent=11 // pred_fallthru
          _
      $region12: #{tpu_custom_call.1} parent=5 // pred_fallthru
        _
      %p255 = scmp.lt.s32.totalorder %s21, 8
      // Predicated region
      $region21: #{tpu_custom_call.1} parent=5 // pred_check
        %p256 = pneg %p255
      $region22: #{tpu_custom_call.1} parent=5 // pred_check_branch
        %258 = sbr.rel (%p256) target = $region24
      $region23: #{tpu_custom_call.1} parent=5 // pred_region
        // Predicated region
        $region25: #{tpu_custom_call.1} parent=23 // pred_check
          %p259 = pneg %p96
        $region26: #{tpu_custom_call.1} parent=23 // pred_check_branch
          %261 = sbr.rel (%p259) target = $region28
        $region27: #{tpu_custom_call.1} parent=23 // pred_region
          %s262 = sld [smem:[#allocation5]]
          %p263 = scmp.lt.s32.totalorder %s29, %s262
          %s264 = scalar_select %p263, %s30, 0
          %s265 = sld [smem:[#allocation4 + %s29]]
          %s266 = smul.u32 8, %s264
          %p267 = scmp.lt.s32.totalorder %s265, 7
          %s268 = scalar_select %p267, %s265, 7
          %p269 = scmp.lt.s32.totalorder %s266, 7
          %s270 = scalar_select %p269, %s266, 7
          %s271 = smul.addr %s268, 8
          %s272 = sadd.s32 %s270, %s271
          %s273 = smul.addr %s272, 4
          %s274 = scalar_lea.vmem %s3, %s273
          %s275 = sld [smem:[#allocation5]]
          %p276 = scmp.lt.s32.totalorder %s29, %s275
          %s277 = scalar_select %p276, %s30, 0
          %s278 = sld [smem:[#allocation4 + %s29]]
          %s279 = smul.u32 8, %s277
        $region28: #{tpu_custom_call.1} parent=23 // pred_fallthru
          _
        // Predicated region
        $region29: #{tpu_custom_call.1} parent=23 // pred_check
          %p280 = pneg %p132
        $region30: #{tpu_custom_call.1} parent=23 // pred_check_branch
          %282 = sbr.rel (%p280) target = $region32
        $region31: #{tpu_custom_call.1} parent=23 // pred_region
          %s283 = sld [smem:[#allocation5]]
          %p284 = scmp.lt.s32.totalorder %s29, %s283
          %s285 = scalar_select %p284, %s30, 0
          %s286 = sld [smem:[#allocation4 + %s29]]
          %s287 = smul.u32 8, %s285
          %p288 = scmp.lt.s32.totalorder %s286, 7
          %s289 = scalar_select %p288, %s286, 7
          %p290 = scmp.lt.s32.totalorder %s287, 7
          %s291 = scalar_select %p290, %s287, 7
          %s292 = smul.addr %s289, 8
          %s293 = sadd.s32 %s291, %s292
          %s294 = smul.addr %s293, 4
          %s295 = scalar_lea.vmem %s4, %s294
          %s296 = sld [smem:[#allocation5]]
          %p297 = scmp.lt.s32.totalorder %s29, %s296
          %s298 = scalar_select %p297, %s30, 0
          %s299 = sld [smem:[#allocation4 + %s29]]
          %s300 = smul.u32 8, %s298
        $region32: #{tpu_custom_call.1} parent=23 // pred_fallthru
          _
        // Predicated region
        $region33: #{tpu_custom_call.1} parent=23 // pred_check
          %p301 = pneg %p168
        $region34: #{tpu_custom_call.1} parent=23 // pred_check_branch
          %303 = sbr.rel (%p301) target = $region36
        $region35: #{tpu_custom_call.1} parent=23 // pred_region
          %s304 = sld [smem:[#allocation5]]
          %p305 = scmp.lt.s32.totalorder %s29, %s304
          %s306 = scalar_select %p305, %s30, 0
          %s307 = sld [smem:[#allocation4 + %s29]]
          %p308 = scmp.lt.s32.totalorder %s307, 7
          %s309 = scalar_select %p308, %s307, 7
          %p310 = scmp.lt.s32.totalorder %s306, 0
          %s311 = scalar_select %p310, %s306, 0
          %s312 = smul.addr %s309, 2
          %s313 = sadd.s32 %s311, %s312
          %s314 = smul.addr %s313, 4
          %s315 = scalar_lea.vmem %s5, %s314
          %s316 = sld [smem:[#allocation5]]
          %p317 = scmp.lt.s32.totalorder %s29, %s316
          %s318 = scalar_select %p317, %s30, 0
          %s319 = sld [smem:[#allocation4 + %s29]]
        $region36: #{tpu_custom_call.1} parent=23 // pred_fallthru
          _
      $region24: #{tpu_custom_call.1} parent=5 // pred_fallthru
        _
      %p320 = scmp.le.s32.totalorder 1, %s21
      %p321 = scmp.lt.s32.totalorder %s21, 9
      %p322 = pnand %p320, %p321
      %p323 = pneg %p322
      // Predicated region
      $region37: #{tpu_custom_call.1} parent=5 // pred_check
        _
      $region38: #{tpu_custom_call.1} parent=5 // pred_check_branch
        %325 = sbr.rel (%p322) target = $region40
      $region39: #{tpu_custom_call.1} parent=5 // pred_region
        %s326 = ssub.s32 %s21, 1
        %p327 = scmp.lt.s32.totalorder %s31, 0
        %s328 = scalar_select %p327, %s31, 0
        %s329 = smul.addr %s328, 4
        %s330 = scalar_lea.vmem %s2, %s329
        %p331 = pneg %p66
        %p332 = pneg %p63
        %s333 = sld [smem:[#allocation5]]
        %p334 = scmp.lt.s32.totalorder %s32, %s333
        %s335 = scalar_select %p334, %s33, 0
        %s336 = sld [smem:[#allocation4 + %s32]]
        %s337 = smul.u32 8, %s335
        %p338 = scmp.lt.s32.totalorder %s336, 7
        %s339 = scalar_select %p338, %s336, 7
        %p340 = scmp.lt.s32.totalorder %s337, 7
        %s341 = scalar_select %p340, %s337, 7
        %s342 = smul.addr %s339, 8
        %s343 = sadd.s32 %s341, %s342
        %s344 = smul.addr %s343, 4
        %s345 = scalar_lea.vmem %s3, %s344
        %p346 = pneg %p102
        %p347 = pneg %p99
        %s348 = sld [smem:[#allocation5]]
        %p349 = scmp.lt.s32.totalorder %s32, %s348
        %s350 = scalar_select %p349, %s33, 0
        %s351 = sld [smem:[#allocation4 + %s32]]
        %s352 = smul.u32 8, %s350
        %p353 = scmp.lt.s32.totalorder %s351, 7
        %s354 = scalar_select %p353, %s351, 7
        %p355 = scmp.lt.s32.totalorder %s352, 7
        %s356 = scalar_select %p355, %s352, 7
        %s357 = smul.addr %s354, 8
        %s358 = sadd.s32 %s356, %s357
        %s359 = smul.addr %s358, 4
        %s360 = scalar_lea.vmem %s4, %s359
        %p361 = pneg %p138
        %p362 = pneg %p135
        %s363 = sld [smem:[#allocation5]]
        %p364 = scmp.lt.s32.totalorder %s32, %s363
        %s365 = scalar_select %p364, %s33, 0
        %s366 = sld [smem:[#allocation4 + %s32]]
        %p367 = scmp.lt.s32.totalorder %s366, 7
        %s368 = scalar_select %p367, %s366, 7
        %p369 = scmp.lt.s32.totalorder %s365, 0
        %s370 = scalar_select %p369, %s365, 0
        %s371 = smul.addr %s368, 2
        %s372 = sadd.s32 %s370, %s371
        %s373 = smul.addr %s372, 4
        %s374 = scalar_lea.vmem %s5, %s373
        %p375 = pneg %p174
        %p376 = pneg %p171
        %p377 = scmp.lt.s32.totalorder %s31, 0
        %s378 = scalar_select %p377, %s31, 0
        %s379 = smul.addr %s378, 8
        %s380 = scalar_lea.vmem %s6, %s379
        %p381 = pneg %p200
        %p382 = pneg %p197
        %p383 = pneg %p226
        %p384 = pneg %p223
        %p385 = scmp.lt.s32.totalorder %s31, 0
        %s386 = scalar_select %p385, %s31, 0
        %s387 = smul.addr %s386, 4
        %s388 = scalar_lea.vmem %s2, %s387
        %s389 = sld [smem:[#allocation5]]
        %p390 = scmp.lt.s32.totalorder %s32, %s389
        %s391 = scalar_select %p390, %s33, 0
        %s392 = sld [smem:[#allocation4 + %s32]]
        %s393 = smul.u32 8, %s391
        %p394 = scmp.lt.s32.totalorder %s392, 7
        %s395 = scalar_select %p394, %s392, 7
        %p396 = scmp.lt.s32.totalorder %s393, 7
        %s397 = scalar_select %p396, %s393, 7
        %s398 = smul.addr %s395, 8
        %s399 = sadd.s32 %s397, %s398
        %s400 = smul.addr %s399, 4
        %s401 = scalar_lea.vmem %s3, %s400
        %s402 = sld [smem:[#allocation5]]
        %p403 = scmp.lt.s32.totalorder %s32, %s402
        %s404 = scalar_select %p403, %s33, 0
        %s405 = sld [smem:[#allocation4 + %s32]]
        %s406 = smul.u32 8, %s404
        %s407 = sld [smem:[#allocation5]]
        %p408 = scmp.lt.s32.totalorder %s32, %s407
        %s409 = scalar_select %p408, %s33, 0
        %s410 = sld [smem:[#allocation4 + %s32]]
        %s411 = smul.u32 8, %s409
        %p412 = scmp.lt.s32.totalorder %s410, 7
        %s413 = scalar_select %p412, %s410, 7
        %p414 = scmp.lt.s32.totalorder %s411, 7
        %s415 = scalar_select %p414, %s411, 7
        %s416 = smul.addr %s413, 8
        %s417 = sadd.s32 %s415, %s416
        %s418 = smul.addr %s417, 4
        %s419 = scalar_lea.vmem %s4, %s418
        %s420 = sld [smem:[#allocation5]]
        %p421 = scmp.lt.s32.totalorder %s32, %s420
        %s422 = scalar_select %p421, %s33, 0
        %s423 = sld [smem:[#allocation4 + %s32]]
        %s424 = smul.u32 8, %s422
        %s425 = sld [smem:[#allocation5]]
        %p426 = scmp.lt.s32.totalorder %s32, %s425
        %s427 = scalar_select %p426, %s33, 0
        %s428 = sld [smem:[#allocation4 + %s32]]
        %p429 = scmp.lt.s32.totalorder %s428, 7
        %s430 = scalar_select %p429, %s428, 7
        %p431 = scmp.lt.s32.totalorder %s427, 0
        %s432 = scalar_select %p431, %s427, 0
        %s433 = smul.addr %s430, 2
        %s434 = sadd.s32 %s432, %s433
        %s435 = smul.addr %s434, 4
        %s436 = scalar_lea.vmem %s5, %s435
        %s437 = sld [smem:[#allocation5]]
        %p438 = scmp.lt.s32.totalorder %s32, %s437
        %s439 = scalar_select %p438, %s33, 0
        %s440 = sld [smem:[#allocation4 + %s32]]
        %p441 = scmp.lt.s32.totalorder %s31, 0
        %s442 = scalar_select %p441, %s31, 0
        %s443 = smul.addr %s442, 8
        %s444 = scalar_lea.vmem %s6, %s443
        %p446 = scmp.eq.s32.totalorder %s32, 0
        %p447 = scmp.eq.s32.totalorder %s33, 0
        %p448 = pnand %p446, %p447
        %p449 = pneg %p448
        // Predicated region
        $region41: #{tpu_custom_call.1} parent=39 // pred_check
          _
        $region42: #{tpu_custom_call.1} parent=39 // pred_check_branch
          %451 = sbr.rel (%p448) target = $region44
        $region43: #{tpu_custom_call.1} parent=39 // pred_region
          %vm452 = vcmask 130048
          %453 = vst.msk [vmem:[#allocation2] sm:$0xff] %vm452, 0.0
        $region44: #{tpu_custom_call.1} parent=39 // pred_fallthru
          _
        %s454 = sld [smem:[#allocation5]]
        %p455 = scmp.lt.s32.totalorder %s32, %s454
        // Predicated region
        $region45: #{tpu_custom_call.1} parent=39 // pred_check
          %p456 = pneg %p455
        $region46: #{tpu_custom_call.1} parent=39 // pred_check_branch
          %458 = sbr.rel (%p456) target = $region48
        $region47: #{tpu_custom_call.1} parent=39 // pred_region
          %v459 = vld [vmem:[%s388] sm:$0xf]
          %v460 = vld [vmem:[%s401] sm:$0xf]
          %v461 = vld [vmem:[%s401 + $0x4] sm:$0xf]
          %v462 = vld [vmem:[%s401 + $0x8] sm:$0xf]
          %v463 = vld [vmem:[%s401 + $0xc] sm:$0xf]
          %v464 = vld [vmem:[%s401 + $0x10] sm:$0xf]
          %v465 = vld [vmem:[%s401 + $0x14] sm:$0xf]
          %v466 = vld [vmem:[%s401 + $0x18] sm:$0xf]
          %v467 = vld [vmem:[%s401 + $0x1c] sm:$0xf]
          %v468 = vld [vmem:[%s419] sm:$0xf]
          %v469 = vld [vmem:[%s419 + $0x4] sm:$0xf]
          %v470 = vld [vmem:[%s419 + $0x8] sm:$0xf]
          %v471 = vld [vmem:[%s419 + $0xc] sm:$0xf]
          %v472 = vld [vmem:[%s419 + $0x10] sm:$0xf]
          %v473 = vld [vmem:[%s419 + $0x14] sm:$0xf]
          %v474 = vld [vmem:[%s419 + $0x18] sm:$0xf]
          %v475 = vld [vmem:[%s419 + $0x1c] sm:$0xf]
          %v476 = vld [vmem:[%s436] sm:$0xf]
          %v477 = vld [vmem:[%s436 + $0x4] sm:$0xf]
          %v486 = vunpack.c.l.b16 %v460
          %v487 = vunpack.c.l.b16 %v461
          %v488 = vunpack.c.l.b16 %v462
          %v489 = vunpack.c.l.b16 %v463
          %v490 = vunpack.c.l.b16 %v464
          %v491 = vunpack.c.l.b16 %v465
          %v492 = vunpack.c.l.b16 %v466
          %v493 = vunpack.c.l.b16 %v467
          %v494 = vpack.c.b16 %v487, %v486
          %v495 = vpack.c.b16 %v489, %v488
          %v496 = vpack.c.b16 %v491, %v490
          %v497 = vpack.c.b16 %v493, %v492
          %vm498 = vcmask 130048
          %v500 = vsel %vm498, %v459, 0
          %v503 = vsel %vm498, %v494, 0
          %v506 = vsel %vm498, %v495, 0
          %v509 = vsel %vm498, %v496, 0
          %v512 = vsel %vm498, %v497, 0
          %514 = vmatprep.subr.bf16.mxu0 0
          %515 = vmatpush1.bf16.xpose.msra.mxu0 0
          %516 = vmatprep.subr.bf16.mxu0 0
          %517 = vmatpush1.bf16.xpose.msra.mxu0 0
          %518 = vmatprep.subr.bf16.mxu0 0
          %519 = vmatpush1.bf16.xpose.msra.mxu0 0
          %520 = vmatprep.subr.bf16.mxu0 0
          %521 = vmatpush1.bf16.xpose.msra.mxu0 0
          %522 = vmatprep.subr.bf16.mxu0 0
          %523 = vmatpush1.bf16.xpose.msra.mxu0 %v512
          %524 = vmatprep.subr.bf16.mxu0 0
          %525 = vmatpush1.bf16.xpose.msra.mxu0 %v509
          %526 = vmatprep.subr.bf16.mxu0 0
          %527 = vmatpush1.bf16.xpose.msra.mxu0 %v506
          %528 = vmatprep.subr.bf16.mxu0 0
          %529 = vmatpush1.bf16.xpose.msra.mxu0 %v503
          %530 = vmatprep.subr.bf16.mxu0 0
          %531 = vmatpush2.bf16.xpose.msra.mxu0 0
          %532 = vmatprep.subr.bf16.mxu0 0
          %533 = vmatpush2.bf16.xpose.msra.mxu0 0
          %534 = vmatprep.subr.bf16.mxu0 0
          %535 = vmatpush2.bf16.xpose.msra.mxu0 0
          %536 = vmatprep.subr.bf16.mxu0 0
          %537 = vmatpush2.bf16.xpose.msra.mxu0 0
          %538 = vmatprep.subr.bf16.mxu0 0
          %539 = vmatpush2.bf16.xpose.msra.mxu0 0
          %540 = vmatprep.subr.bf16.mxu0 0
          %541 = vmatpush2.bf16.xpose.msra.mxu0 0
          %542 = vmatprep.subr.bf16.mxu0 0
          %543 = vmatpush2.bf16.xpose.msra.mxu0 0
          %544 = vmatprep.subr.bf16.mxu0 0
          %545 = vmatpush2.bf16.xpose.msra.mxu0 0
          %546 = vmatprep.mubr.bf16.mxu0 0
          %547 = vmatmul.mubr.bf16.gmra.mxu0 %v500
          %v548 = vpop.f32.mrf.mxu0
          %v549 = vadd.f32 0.0, %v548
          %v550 = vpop.f32.mrf.mxu0
          %v551 = vpop.f32.mrf.mxu0
          %v552 = vpop.f32.mrf.mxu0
          %553 = vdwg.mxu0
          %v562 = vunpack.c.l.b16 %v468
          %v563 = vunpack.c.l.b16 %v469
          %v564 = vunpack.c.l.b16 %v470
          %v565 = vunpack.c.l.b16 %v471
          %v566 = vunpack.c.l.b16 %v472
          %v567 = vunpack.c.l.b16 %v473
          %v568 = vunpack.c.l.b16 %v474
          %v569 = vunpack.c.l.b16 %v475
          %v570 = vpack.c.b16 %v563, %v562
          %v571 = vpack.c.b16 %v565, %v564
          %v572 = vpack.c.b16 %v567, %v566
          %v573 = vpack.c.b16 %v569, %v568
          %v575 = vsel %vm498, %v570, 0
          %v578 = vsel %vm498, %v571, 0
          %v581 = vsel %vm498, %v572, 0
          %v584 = vsel %vm498, %v573, 0
          %586 = vmatprep.subr.bf16.mxu0 0
          %587 = vmatpush1.bf16.xpose.msra.mxu0 0
          %588 = vmatprep.subr.bf16.mxu0 0
          %589 = vmatpush1.bf16.xpose.msra.mxu0 0
          %590 = vmatprep.subr.bf16.mxu0 0
          %591 = vmatpush1.bf16.xpose.msra.mxu0 0
          %592 = vmatprep.subr.bf16.mxu0 0
          %593 = vmatpush1.bf16.xpose.msra.mxu0 0
          %594 = vmatprep.subr.bf16.mxu0 0
          %595 = vmatpush1.bf16.xpose.msra.mxu0 %v584
          %596 = vmatprep.subr.bf16.mxu0 0
          %597 = vmatpush1.bf16.xpose.msra.mxu0 %v581
          %598 = vmatprep.subr.bf16.mxu0 0
          %599 = vmatpush1.bf16.xpose.msra.mxu0 %v578
          %600 = vmatprep.subr.bf16.mxu0 0
          %601 = vmatpush1.bf16.xpose.msra.mxu0 %v575
          %602 = vmatprep.subr.bf16.mxu0 0
          %603 = vmatpush2.bf16.xpose.msra.mxu0 0
          %604 = vmatprep.subr.bf16.mxu0 0
          %605 = vmatpush2.bf16.xpose.msra.mxu0 0
          %606 = vmatprep.subr.bf16.mxu0 0
          %607 = vmatpush2.bf16.xpose.msra.mxu0 0
          %608 = vmatprep.subr.bf16.mxu0 0
          %609 = vmatpush2.bf16.xpose.msra.mxu0 0
          %610 = vmatprep.subr.bf16.mxu0 0
          %611 = vmatpush2.bf16.xpose.msra.mxu0 0
          %612 = vmatprep.subr.bf16.mxu0 0
          %613 = vmatpush2.bf16.xpose.msra.mxu0 0
          %614 = vmatprep.subr.bf16.mxu0 0
          %615 = vmatpush2.bf16.xpose.msra.mxu0 0
          %616 = vmatprep.subr.bf16.mxu0 0
          %617 = vmatpush2.bf16.xpose.msra.mxu0 0
          %618 = vmatprep.mubr.bf16.mxu0 0
          %619 = vmatmul.mubr.bf16.gmra.mxu0 %v500
          %v620 = vpop.f32.mrf.mxu0
          %v621 = vadd.f32 0.0, %v620
          %v622 = vpop.f32.mrf.mxu0
          %v623 = vpop.f32.mrf.mxu0
          %v624 = vpop.f32.mrf.mxu0
          %625 = vdwg.mxu0
          %v626 = vxor.u32 %v549, 2147483648
          %v627 = vmul.f32 %v626, 1.442695
          %v628 = vpow.pop %v627
          %v629 = vadd.f32 %v628, 1.0
          %v630 = vrcp.pop %v629
          %v631 = vmul.f32 1.0, %v630
          %v632 = vmul.f32 %v549, %v631
          %v633 = vmul.f32 %v632, %v621
          %v634 = vpack.c.bf16 %v633, %v633
          %v637 = vunpack.c.l.b16 %v476
          %v638 = vunpack.c.l.b16 %v477
          %v639 = vpack.c.b16 %v638, %v637
          %vm640 = vcmask 523264
          %v642 = vsel %vm640, %v634, 0
          %v645 = vsel %vm640, %v639, 0
          %647 = vmatprep.subr.bf16.mxu0 0
          %648 = vmatpush1.bf16.xpose.msra.mxu0 0
          %649 = vmatprep.subr.bf16.mxu0 0
          %650 = vmatpush1.bf16.xpose.msra.mxu0 0
          %651 = vmatprep.subr.bf16.mxu0 0
          %652 = vmatpush1.bf16.xpose.msra.mxu0 0
          %653 = vmatprep.subr.bf16.mxu0 0
          %654 = vmatpush1.bf16.xpose.msra.mxu0 0
          %655 = vmatprep.subr.bf16.mxu0 0
          %656 = vmatpush1.bf16.xpose.msra.mxu0 0
          %657 = vmatprep.subr.bf16.mxu0 0
          %658 = vmatpush1.bf16.xpose.msra.mxu0 0
          %659 = vmatprep.subr.bf16.mxu0 0
          %660 = vmatpush1.bf16.xpose.msra.mxu0 0
          %661 = vmatprep.subr.bf16.mxu0 0
          %662 = vmatpush1.bf16.xpose.msra.mxu0 %v645
          %663 = vmatprep.subr.bf16.mxu0 0
          %664 = vmatpush2.bf16.xpose.msra.mxu0 0
          %665 = vmatprep.subr.bf16.mxu0 0
          %666 = vmatpush2.bf16.xpose.msra.mxu0 0
          %667 = vmatprep.subr.bf16.mxu0 0
          %668 = vmatpush2.bf16.xpose.msra.mxu0 0
          %669 = vmatprep.subr.bf16.mxu0 0
          %670 = vmatpush2.bf16.xpose.msra.mxu0 0
          %671 = vmatprep.subr.bf16.mxu0 0
          %672 = vmatpush2.bf16.xpose.msra.mxu0 0
          %673 = vmatprep.subr.bf16.mxu0 0
          %674 = vmatpush2.bf16.xpose.msra.mxu0 0
          %675 = vmatprep.subr.bf16.mxu0 0
          %676 = vmatpush2.bf16.xpose.msra.mxu0 0
          %677 = vmatprep.subr.bf16.mxu0 0
          %678 = vmatpush2.bf16.xpose.msra.mxu0 0
          %679 = vmatprep.mubr.bf16.mxu0 0
          %680 = vmatmul.mubr.bf16.gmra.mxu0 %v642
          %v681 = vpop.f32.mrf.mxu0
          %v682 = vadd.f32 0.0, %v681
          %v683 = vpop.f32.mrf.mxu0
          %v684 = vpop.f32.mrf.mxu0
          %v685 = vpop.f32.mrf.mxu0
          %686 = vdwg.mxu0
          %s687 = sld [smem:[#allocation4 + %s32]]
          %v688 = vld [vmem:[%s444] sm:$0xff]
          %v689 = vlaneseq
          %v690 = vand.u32 %v689, 127
          %v691 = vstv %s687
          %vm692 = vcmp.eq.s32.totalorder %v690, %v691
          %v693 = vsel %vm692, %v688, 0.0
          %vm694 = vcmask 64512
          %v695 = vsel %vm694, %v693, 0.0
          %696 = vadd.xlane.f32.xlu0 %v695
          %v697 = vpop.xlane.xlu0 %696
          %v698 = vld [vmem:[#allocation2] sm:$0xff]
          %v699 = vmul.f32 %v697, %v682
          %v700 = vadd.f32 %v698, %v699
          %701 = vst.msk [vmem:[#allocation2] sm:$0xff] %vm498, %v700
        $region48: #{tpu_custom_call.1} parent=39 // pred_fallthru
          _
        %p702 = scmp.eq.s32.totalorder %s32, 7
        %p703 = pnand %p702, %p447
        %p704 = pneg %p703
        // Predicated region
        $region49: #{tpu_custom_call.1} parent=39 // pred_check
          _
        $region50: #{tpu_custom_call.1} parent=39 // pred_check_branch
          %706 = sbr.rel (%p703) target = $region52
        $region51: #{tpu_custom_call.1} parent=39 // pred_region
          %v707 = vld [vmem:[#allocation2] sm:$0xff]
          %v708 = vpack.c.bf16 %v707, %v707
          %vm709 = vcmask 125952
          %710 = vst.msk [vmem:[#allocation6] sm:$0xf] %vm709, %v708
        $region52: #{tpu_custom_call.1} parent=39 // pred_fallthru
          _
        // Predicated region
        $region53: #{tpu_custom_call.1} parent=39 // pred_check
          %p711 = pneg %p223
        $region54: #{tpu_custom_call.1} parent=39 // pred_check_branch
          %713 = sbr.rel (%p711) target = $region56
        $region55: #{tpu_custom_call.1} parent=39 // pred_region
          %s715 = ssub.s32 64, 64
          %716 = vsyncadd [#allocation7], %s715
          %s717 = smul.addr %s31, 64
          %s718 = scalar_lea.hbm %s7, %s717
          %s720 = sshll.u32 [#allocation6], 4
          %s721 = int_to_ptr.vmem [resolvable:$true] %s720
          %723 = dma.vmem_to_hbm [thread:$0]  %s721, 64, %s718, [#allocation7]
        $region56: #{tpu_custom_call.1} parent=39 // pred_fallthru
          _
        // Predicated region
        $region57: #{tpu_custom_call.1} parent=39 // pred_check
          %p724 = pneg %p223
        $region58: #{tpu_custom_call.1} parent=39 // pred_check_branch
          %726 = sbr.rel (%p724) target = $region60
        $region59: #{tpu_custom_call.1} parent=39 // pred_region
          %727 = dma.done [#allocation7], 64
        $region60: #{tpu_custom_call.1} parent=39 // pred_fallthru
          _
      $region40: #{tpu_custom_call.1} parent=5 // pred_fallthru
        _
      %p728 = scmp.le.s32.totalorder 2, %s21
      // Predicated region
      $region61: #{tpu_custom_call.1} parent=5 // pred_check
        %p729 = pneg %p728
      $region62: #{tpu_custom_call.1} parent=5 // pred_check_branch
        %731 = sbr.rel (%p729) target = $region64
      $region63: #{tpu_custom_call.1} parent=5 // pred_region
        %s732 = ssub.s32 %s21, 2
      $region64: #{tpu_custom_call.1} parent=5 // pred_fallthru
        _
    $region6: #{tpu_custom_call.1} parent=1 // loop_footer
      %s25 = sadd.s32 1, %s21
    $region7: #{tpu_custom_call.1} parent=1 // loop_footer_branch
      %20 = sbr.rel target = $region3
    $region8: #{tpu_custom_call.1} parent=1 // loop_exit
      _
    %733 = vsyncpa [#allocation7], 1
    %s734 = scalar_lea.sflag [#allocation7], 1
    %735 = vsyncpa %s734, 1

</llo_original>
